<compile_context>
chip_gen: v7x
topology: tpu7x:2x2x1
jax: 0.10.0
libtpu: 0.0.40
codegen_flags: <defaults>
</compile_context>

<pallas_src>
import functools

import jax
import jax.numpy as jnp
from jax.experimental import pallas as pl
from jax.experimental.pallas import tpu as pltpu


# Matmul operand dtype (accumulation is always f32 via preferred_element_type).
MATMUL_DTYPE = jnp.float32


def _num_tensorcores():
    """Best-effort TensorCores-per-chip count (for the megacore grid split)."""
    try:
        kind = jax.devices()[0].device_kind.lower()
    except Exception:
        return 1
    if "lite" in kind or "v5e" in kind or "v6e" in kind:
        return 1
    if "v7" in kind or "v4" in kind or "v5p" in kind:
        return 2
    return 1


# ----------------------------------------------------------------------------
# Pallas kernel
# ----------------------------------------------------------------------------
def _down_pixel_kernel(H, Wp, HWp, BN, C2, C, cd,
                       y_ref, pos_ref, attw_ref, border_ref,
                       w4_ref, bias4_ref, w5_ref, b5_ref,
                       o_ref, im2col_ref):
    N = BN * HWp

    def lane_tile(row):                      # (k, HWp) -> (k, BN*HWp)
        return row if BN == 1 else jnp.concatenate([row] * BN, axis=1)

    # ---- pos_w add + channel attention, per image, folded into the lane dim ----
    # TODO(synk): Channel_attention_block_Param source unavailable; implemented
    # as softmax(param)-weighted spatial pooling + per-channel sigmoid gate
    # (channels=None => no channel MLP), matching the pure-JAX reference below.
    pos = pos_ref[...]                       # (C2, 1)
    attw = attw_ref[...]                     # (1, HWp); zero on pad lanes
    cols = []
    for bn in range(BN):
        xb = y_ref[bn] + pos                 # (C2, HWp)
        desc = jnp.sum(xb * attw, axis=1, keepdims=True)
        cols.append(xb * jax.nn.sigmoid(desc))
    x = cols[0] if BN == 1 else jnp.concatenate(cols, axis=1)   # (C2, N)

    # ---- border-validity rows (gate zero-padding taps, folded-image wrap,
    #      and padded lanes) ----
    border = border_ref[...]                 # (4, HWp) f32
    m_top = lane_tile(border[0:1, :])
    m_bot = lane_tile(border[1:2, :])
    m_left = lane_tile(border[2:3, :])
    m_right = lane_tile(border[3:4, :])

    def im2col_3x3(v, cin):
        """9-tap im2col of v (cin, N) into im2col_ref[:9*cin] with 4 XLU rolls.

        Scratch row order is dx-major ([left | centre | right]); each block is
        ordered dy = top, mid, bot — must match the folded weight layout.
        """
        top = pltpu.roll(v, shift=Wp, axis=1) * m_top        # source row h-1
        bot = pltpu.roll(v, shift=N - Wp, axis=1) * m_bot    # source row h+1
        rows = jnp.concatenate([top, v, bot], axis=0)        # (3*cin, N)
        im2col_ref[3 * cin:6 * cin, :] = rows.astype(cd)                       # dx=1
        im2col_ref[0:3 * cin, :] = (pltpu.roll(rows, shift=1, axis=1)
                                    * m_left).astype(cd)                       # dx=0
        im2col_ref[6 * cin:9 * cin, :] = (pltpu.roll(rows, shift=N - 1, axis=1)
                                          * m_right).astype(cd)                # dx=2

    # ---- conv3 (1x1, C2->C) folded into conv4 (3x3): ONE (C,9C2)@(9C2,N) ----
    im2col_3x3(x, C2)
    z = jnp.dot(w4_ref[...], im2col_ref[0:9 * C2, :],
                preferred_element_type=jnp.float32)
    z = z + lane_tile(bias4_ref[...])        # composed, spatially varying bias

    # ---- conv5 (3x3, C->C) ----
    im2col_3x3(z, C)
    z = jnp.dot(w5_ref[...], im2col_ref[0:9 * C, :],
                preferred_element_type=jnp.float32) + b5_ref[...]

    # ---- per-image lane-dense stores straight into the (B, C, H*Wp) layout ----
    for bn in range(BN):
        o_ref[bn] = z[:, bn * HWp:(bn + 1) * HWp].astype(o_ref.dtype)


# ----------------------------------------------------------------------------
# Wrapper
# ----------------------------------------------------------------------------
@functools.partial(jax.jit, static_argnames=("stride",))
def down_pixel_w_pos(x, params, stride=2):
    """x: (B, C, H, W) float32 NCHW.  Returns (B, C, H, W // stride)."""
    B, c, H, W = x.shape
    Wp = W // stride
    C2, C = c * stride, c
    HW = H * Wp
    HWp = ((HW + 127) // 128) * 128          # pad per-image extent to full lanes
    pad = HWp - HW

    # ---- pixel-unshuffle along width -> channel-major, spatial-last ----
    y = x.reshape(B, c, H, Wp, stride)
    y = jnp.transpose(y, (0, 1, 4, 2, 3)).reshape(B, C2, HW)
    if pad:
        y = jnp.pad(y, ((0, 0), (0, 0), (0, pad)))

    # ---- grid: split the batch over TensorCores only where there are two ----
    num_tc = _num_tensorcores()
    G = num_tc if (num_tc > 1 and B % num_tc == 0) else 1
    BN = B // G
    N = BN * HWp

    # pos_w broadcast over (c, stride) -> per-(new)channel column vector
    pos_chan = jnp.tile(params["pos_w"], (c,)).reshape(C2, 1)

    # channel-attention spatial weights; pad lanes get weight 0 so they never
    # contribute to the pooled descriptor.
    attw = jax.nn.softmax(params["att"].reshape(-1)).reshape(1, HW)
    if pad:
        attw = jnp.pad(attw, ((0, 0), (0, pad)))

    # 4 border-validity rows (source row h-1 / h+1, source col w-1 / w+1);
    # pad lanes are 0 in all four, so padded garbage never leaks into outputs.
    row = jnp.repeat(jnp.arange(H), Wp)
    col = jnp.tile(jnp.arange(Wp), H)
    border = jnp.stack([(row >= 1), (row <= H - 2),
                        (col >= 1), (col <= Wp - 2)],
                       axis=0).astype(jnp.float32)
    if pad:
        border = jnp.pad(border, ((0, 0), (0, pad)))

    # ---- fold conv3 (1x1) into conv4 (3x3): W4'_k = w4_k^T @ w3^T ----
    w3T = params["w3"].T                                        # (C, C2)
    w4, w5 = params["w4"], params["w5"]                         # HWIO (3,3,C,C)
    # tap order: dx-major, dy inner -> matches the kernel's im2col row order
    w4p = jnp.concatenate([w4[dy, dx].T @ w3T
                           for dx in range(3) for dy in range(3)],
                          axis=1).astype(MATMUL_DTYPE)          # (C, 9*C2)
    w5p = jnp.concatenate([w5[dy, dx].T
                           for dx in range(3) for dy in range(3)],
                          axis=1).astype(MATMUL_DTYPE)          # (C, 9*C)

    # composed bias: zero padding makes conv4(b3) spatially varying near the
    # borders, so fold b3 through conv4 as a per-position (C, HW) bias map.
    b3, b4 = params["b3"], params["b4"]
    wb = jnp.stack([w4[dy, dx].T @ b3
                    for dy in range(3) for dx in range(3)], axis=0)    # (9, C)
    mask9 = jnp.stack(
        [((row + dy - 1 >= 0) & (row + dy - 1 <= H - 1) &
          (col + dx - 1 >= 0) & (col + dx - 1 <= Wp - 1))
         for dy in range(3) for dx in range(3)], axis=0).astype(jnp.float32)
    bias4 = b4.reshape(C, 1) + wb.T @ mask9                            # (C, HW)
    if pad:
        bias4 = jnp.pad(bias4, ((0, 0), (0, pad)))
    b5 = params["b5"].reshape(C, 1)

    kernel = functools.partial(_down_pixel_kernel, H, Wp, HWp, BN, C2, C,
                               MATMUL_DTYPE)

    out = pl.pallas_call(
        kernel,
        out_shape=jax.ShapeDtypeStruct((B, C, HWp), jnp.float32),
        grid_spec=pltpu.PrefetchScalarGridSpec(
            num_scalar_prefetch=0,
            grid=(G,),
            in_specs=[
                pl.BlockSpec((BN, C2, HWp), lambda g: (g, 0, 0)),  # activations
                pl.BlockSpec((C2, 1), lambda g: (0, 0)),           # pos column
                pl.BlockSpec((1, HWp), lambda g: (0, 0)),          # attention w
                pl.BlockSpec((4, HWp), lambda g: (0, 0)),          # border rows
                pl.BlockSpec((C, 9 * C2), lambda g: (0, 0)),       # w4 ∘ w3
                pl.BlockSpec((C, HWp), lambda g: (0, 0)),          # composed bias
                pl.BlockSpec((C, 9 * C), lambda g: (0, 0)),        # w5
                pl.BlockSpec((C, 1), lambda g: (0, 0)),            # b5
            ],
            out_specs=pl.BlockSpec((BN, C, HWp), lambda g: (g, 0, 0)),
            scratch_shapes=[pltpu.VMEM((9 * C2, N), MATMUL_DTYPE)],  # im2col
        ),
        compiler_params=pltpu.CompilerParams(
            dimension_semantics=("parallel",),
            vmem_limit_bytes=64 * 1024 * 1024),
    )(y, pos_chan, attw, border, w4p, bias4, w5p, b5)

    # drop lane padding; kernel already stored (B, C, H*Wp) -> pure reshape,
    # no post-kernel HBM transpose pass.
    return out[:, :, :HW].reshape(B, C, H, Wp)


# ----------------------------------------------------------------------------
# Pure-JAX reference (same assumed semantics) for a correctness check
# ----------------------------------------------------------------------------
def reference_forward(x, params, stride=2):
    B, c, H, W = x.shape
    Wp = W // stride
    out = x.reshape(B, c, H, Wp, stride) + params["pos_w"].reshape(1, 1, 1, 1, stride)
    out = jnp.transpose(out, (0, 1, 4, 2, 3)).reshape(B, c * stride, H, Wp)

    aw = jax.nn.softmax(params["att"].reshape(-1)).reshape(1, 1, H, Wp)
    desc = jnp.sum(out * aw, axis=(2, 3), keepdims=True)
    out = out * jax.nn.sigmoid(desc)

    out = jnp.einsum("bihw,io->bohw", out, params["w3"]) + params["b3"].reshape(1, -1, 1, 1)

    def conv3x3(z, w_hwio, bias):
        y = jax.lax.conv_general_dilated(
            z, w_hwio, window_strides=(1, 1), padding=((1, 1), (1, 1)),
            dimension_numbers=("NCHW", "HWIO", "NCHW"))
        return y + bias.reshape(1, -1, 1, 1)

    out = conv3x3(out, params["w4"], params["b4"])
    out = conv3x3(out, params["w5"], params["b5"])
    return out


# ----------------------------------------------------------------------------
def make_params(key, in_chs, stride, H, Wp):
    C2 = in_chs * stride
    C = in_chs
    ks = jax.random.split(key, 8)
    tn = lambda k, shape, std: std * jnp.clip(jax.random.normal(k, shape, jnp.float32), -2.0, 2.0)
    return {
        "pos_w": tn(ks[0], (stride,), 0.02),                   # (1,1,1,1,stride) flattened
        "att":   tn(ks[1], (H, Wp), 0.02),                     # chs_attw spatial param
        "w3": jax.random.normal(ks[2], (C2, C), jnp.float32) / jnp.sqrt(C2),
        "b3": 0.01 * jax.random.normal(ks[3], (C,), jnp.float32),
        "w4": jax.random.normal(ks[4], (3, 3, C, C), jnp.float32) / jnp.sqrt(9 * C),  # HWIO
        "b4": 0.01 * jax.random.normal(ks[5], (C,), jnp.float32),
        "w5": jax.random.normal(ks[6], (3, 3, C, C), jnp.float32) / jnp.sqrt(9 * C),  # HWIO
        "b5": 0.01 * jax.random.normal(ks[7], (C,), jnp.float32),
    }


if __name__ == "__main__":
    key = jax.random.PRNGKey(0)

    def check(B, in_chs, H, W, stride, k):
        Wp = W // stride
        kx, kp = jax.random.split(k)
        x = jax.random.normal(kx, (B, in_chs, H, W), jnp.float32)
        params = make_params(kp, in_chs, stride, H, Wp)
        out = jax.block_until_ready(down_pixel_w_pos(x, params, stride=stride))
        ref = jax.block_until_ready(reference_forward(x, params, stride=stride))
        assert out.shape == (B, in_chs, H, Wp), out.shape
        err = float(jnp.max(jnp.abs(out - ref)))
        assert jnp.allclose(out, ref, atol=1e-3, rtol=1e-3), err

    k1, k2 = jax.random.split(key)
    check(2, 8, 16, 16, 2, k1)   # lane-aligned case: H*W' = 128, even batch
    check(3, 8, 6, 20, 2, k2)    # unaligned H*W' = 60 -> padded to 128; odd batch

    print("KERNEL_OK")
</pallas_src>

<mosaic_0001>
module attributes {stable_mosaic.version = 11 : i64} {
  func.func @_down_pixel_kernel(%arg0: i32, %arg1: memref<2x16x128xf32, #tpu.memory_space<vmem>>, %arg2: memref<16x1xf32, #tpu.memory_space<vmem>>, %arg3: memref<1x128xf32, #tpu.memory_space<vmem>>, %arg4: memref<4x128xf32, #tpu.memory_space<vmem>>, %arg5: memref<8x144xf32, #tpu.memory_space<vmem>>, %arg6: memref<8x128xf32, #tpu.memory_space<vmem>>, %arg7: memref<8x72xf32, #tpu.memory_space<vmem>>, %arg8: memref<8x1xf32, #tpu.memory_space<vmem>>, %arg9: memref<2x8x128xf32, #tpu.memory_space<vmem>>, %arg10: memref<144x256xf32, #tpu.memory_space<vmem>>) attributes {dimension_semantics = [#tpu.dimension_semantics<parallel>], iteration_bounds = array<i64: 1>, scalar_prefetch = 0 : i64, scratch_operands = 1 : i64, tpu.core_type = #tpu.core_type<tc>, window_params = [{transform_indices = @transform_0, window_bounds = array<i64: 2, 16, 128>}, {pipeline_mode = #tpu.pipeline_mode<synchronous>, transform_indices = @transform_1, window_bounds = array<i64: 16, 1>}, {pipeline_mode = #tpu.pipeline_mode<synchronous>, transform_indices = @transform_2, window_bounds = array<i64: 1, 128>}, {pipeline_mode = #tpu.pipeline_mode<synchronous>, transform_indices = @transform_3, window_bounds = array<i64: 4, 128>}, {pipeline_mode = #tpu.pipeline_mode<synchronous>, transform_indices = @transform_4, window_bounds = array<i64: 8, 144>}, {pipeline_mode = #tpu.pipeline_mode<synchronous>, transform_indices = @transform_5, window_bounds = array<i64: 8, 128>}, {pipeline_mode = #tpu.pipeline_mode<synchronous>, transform_indices = @transform_6, window_bounds = array<i64: 8, 72>}, {pipeline_mode = #tpu.pipeline_mode<synchronous>, transform_indices = @transform_7, window_bounds = array<i64: 8, 1>}, {transform_indices = @transform_8, window_bounds = array<i64: 2, 8, 128>}]} {
    %c0 = arith.constant 0 : index
    %c0_0 = arith.constant 0 : index
    %0 = vector.load %arg2[%c0, %c0_0] : memref<16x1xf32, #tpu.memory_space<vmem>>, vector<16x1xf32>
    %c0_1 = arith.constant 0 : index
    %c0_2 = arith.constant 0 : index
    %1 = vector.load %arg3[%c0_1, %c0_2] : memref<1x128xf32, #tpu.memory_space<vmem>>, vector<1x128xf32>
    %c0_3 = arith.constant 0 : index
    %c0_4 = arith.constant 0 : index
    %c0_5 = arith.constant 0 : index
    %2 = vector.load %arg1[%c0_3, %c0_4, %c0_5] : memref<2x16x128xf32, #tpu.memory_space<vmem>>, vector<1x16x128xf32>
    %3 = vector.shape_cast %2 : vector<1x16x128xf32> to vector<16x128xf32>
    %4 = vector.broadcast %0 : vector<16x1xf32> to vector<16x128xf32>
    %5 = arith.addf %3, %4 : vector<16x128xf32>
    %6 = vector.broadcast %1 : vector<1x128xf32> to vector<16x128xf32>
    %7 = arith.mulf %5, %6 : vector<16x128xf32>
    %cst = arith.constant dense<0.000000e+00> : vector<16xf32>
    %8 = vector.multi_reduction <add>, %7, %cst [1] : vector<16x128xf32> to vector<16xf32>
    %9 = vector.shape_cast %8 : vector<16xf32> to vector<16x1xf32>
    %10 = arith.negf %9 : vector<16x1xf32>
    %11 = math.exp %10 : vector<16x1xf32>
    %cst_6 = arith.constant 1.000000e+00 : f32
    %12 = vector.broadcast %cst_6 : f32 to vector<16x1xf32>
    %13 = arith.addf %12, %11 : vector<16x1xf32>
    %14 = arith.divf %12, %13 : vector<16x1xf32>
    %15 = vector.broadcast %14 : vector<16x1xf32> to vector<16x128xf32>
    %16 = arith.mulf %5, %15 : vector<16x128xf32>
    %c1 = arith.constant 1 : index
    %c0_7 = arith.constant 0 : index
    %c0_8 = arith.constant 0 : index
    %17 = vector.load %arg1[%c1, %c0_7, %c0_8] : memref<2x16x128xf32, #tpu.memory_space<vmem>>, vector<1x16x128xf32>
    %18 = vector.shape_cast %17 : vector<1x16x128xf32> to vector<16x128xf32>
    %19 = vector.broadcast %0 : vector<16x1xf32> to vector<16x128xf32>
    %20 = arith.addf %18, %19 : vector<16x128xf32>
    %21 = vector.broadcast %1 : vector<1x128xf32> to vector<16x128xf32>
    %22 = arith.mulf %20, %21 : vector<16x128xf32>
    %cst_9 = arith.constant dense<0.000000e+00> : vector<16xf32>
    %23 = vector.multi_reduction <add>, %22, %cst_9 [1] : vector<16x128xf32> to vector<16xf32>
    %24 = vector.shape_cast %23 : vector<16xf32> to vector<16x1xf32>
    %25 = arith.negf %24 : vector<16x1xf32>
    %26 = math.exp %25 : vector<16x1xf32>
    %cst_10 = arith.constant 1.000000e+00 : f32
    %27 = vector.broadcast %cst_10 : f32 to vector<16x1xf32>
    %28 = arith.addf %27, %26 : vector<16x1xf32>
    %29 = arith.divf %27, %28 : vector<16x1xf32>
    %30 = vector.broadcast %29 : vector<16x1xf32> to vector<16x128xf32>
    %31 = arith.mulf %20, %30 : vector<16x128xf32>
    %32 = tpu.concatenate %16, %31 in 1 : vector<16x128xf32>, vector<16x128xf32> -> vector<16x256xf32>
    %c0_11 = arith.constant 0 : index
    %c0_12 = arith.constant 0 : index
    %33 = vector.load %arg4[%c0_11, %c0_12] : memref<4x128xf32, #tpu.memory_space<vmem>>, vector<4x128xf32>
    %34 = vector.extract_strided_slice %33 {offsets = [0, 0], sizes = [1, 128], strides = [1, 1]} : vector<4x128xf32> to vector<1x128xf32>
    %35 = tpu.concatenate %34, %34 in 1 : vector<1x128xf32>, vector<1x128xf32> -> vector<1x256xf32>
    %36 = vector.extract_strided_slice %33 {offsets = [1, 0], sizes = [1, 128], strides = [1, 1]} : vector<4x128xf32> to vector<1x128xf32>
    %37 = tpu.concatenate %36, %36 in 1 : vector<1x128xf32>, vector<1x128xf32> -> vector<1x256xf32>
    %38 = vector.extract_strided_slice %33 {offsets = [2, 0], sizes = [1, 128], strides = [1, 1]} : vector<4x128xf32> to vector<1x128xf32>
    %39 = tpu.concatenate %38, %38 in 1 : vector<1x128xf32>, vector<1x128xf32> -> vector<1x256xf32>
    %40 = vector.extract_strided_slice %33 {offsets = [3, 0], sizes = [1, 128], strides = [1, 1]} : vector<4x128xf32> to vector<1x128xf32>
    %41 = tpu.concatenate %40, %40 in 1 : vector<1x128xf32>, vector<1x128xf32> -> vector<1x256xf32>
    %c8_i32 = arith.constant 8 : i32
    %42 = tpu.dynamic_rotate %32 by %c8_i32 dim 1 : vector<16x256xf32>, i32 -> vector<16x256xf32>
    %43 = vector.broadcast %35 : vector<1x256xf32> to vector<16x256xf32>
    %44 = arith.mulf %42, %43 : vector<16x256xf32>
    %c248_i32 = arith.constant 248 : i32
    %45 = tpu.dynamic_rotate %32 by %c248_i32 dim 1 : vector<16x256xf32>, i32 -> vector<16x256xf32>
    %46 = vector.broadcast %37 : vector<1x256xf32> to vector<16x256xf32>
    %47 = arith.mulf %45, %46 : vector<16x256xf32>
    %48 = tpu.concatenate %44, %32, %47 in 0 : vector<16x256xf32>, vector<16x256xf32>, vector<16x256xf32> -> vector<48x256xf32>
    %c48 = arith.constant 48 : index
    %c0_13 = arith.constant 0 : index
    %49 = vector.load %arg10[%c48, %c0_13] : memref<144x256xf32, #tpu.memory_space<vmem>>, vector<48x256xf32>
    tpu.vector_store %arg10[%c48, %c0_13], %48 {strides = array<i32>} : memref<144x256xf32, #tpu.memory_space<vmem>>, vector<48x256xf32>,
    %c1_i32 = arith.constant 1 : i32
    %50 = tpu.dynamic_rotate %48 by %c1_i32 dim 1 : vector<48x256xf32>, i32 -> vector<48x256xf32>
    %51 = vector.broadcast %39 : vector<1x256xf32> to vector<48x256xf32>
    %52 = arith.mulf %50, %51 : vector<48x256xf32>
    %c0_14 = arith.constant 0 : index
    %c0_15 = arith.constant 0 : index
    %53 = vector.load %arg10[%c0_14, %c0_15] : memref<144x256xf32, #tpu.memory_space<vmem>>, vector<48x256xf32>
    tpu.vector_store %arg10[%c0_14, %c0_15], %52 {strides = array<i32>} : memref<144x256xf32, #tpu.memory_space<vmem>>, vector<48x256xf32>,
    %c255_i32 = arith.constant 255 : i32
    %54 = tpu.dynamic_rotate %48 by %c255_i32 dim 1 : vector<48x256xf32>, i32 -> vector<48x256xf32>
    %55 = vector.broadcast %41 : vector<1x256xf32> to vector<48x256xf32>
    %56 = arith.mulf %54, %55 : vector<48x256xf32>
    %c96 = arith.constant 96 : index
    %c0_16 = arith.constant 0 : index
    %57 = vector.load %arg10[%c96, %c0_16] : memref<144x256xf32, #tpu.memory_space<vmem>>, vector<48x256xf32>
    tpu.vector_store %arg10[%c96, %c0_16], %56 {strides = array<i32>} : memref<144x256xf32, #tpu.memory_space<vmem>>, vector<48x256xf32>,
    %c0_17 = arith.constant 0 : index
    %c0_18 = arith.constant 0 : index
    %58 = vector.load %arg5[%c0_17, %c0_18] : memref<8x144xf32, #tpu.memory_space<vmem>>, vector<8x144xf32>
    %c0_19 = arith.constant 0 : index
    %c0_20 = arith.constant 0 : index
    %59 = vector.load %arg10[%c0_19, %c0_20] : memref<144x256xf32, #tpu.memory_space<vmem>>, vector<144x256xf32>
    %cst_21 = arith.constant dense<0.000000e+00> : vector<8x256xf32>
    %60 = tpu.matmul %58, %59, %cst_21 {dimension_numbers = #tpu.dot_dimension_numbers<[1], [0], [0], [1], [0, 0, 1, 1], [], []>} : vector<8x144xf32>, vector<144x256xf32>, vector<8x256xf32> -> vector<8x256xf32>
    %c0_22 = arith.constant 0 : index
    %c0_23 = arith.constant 0 : index
    %61 = vector.load %arg6[%c0_22, %c0_23] : memref<8x128xf32, #tpu.memory_space<vmem>>, vector<8x128xf32>
    %62 = tpu.concatenate %61, %61 in 1 : vector<8x128xf32>, vector<8x128xf32> -> vector<8x256xf32>
    %63 = arith.addf %60, %62 : vector<8x256xf32>
    %c8_i32_24 = arith.constant 8 : i32
    %64 = tpu.dynamic_rotate %63 by %c8_i32_24 dim 1 : vector<8x256xf32>, i32 -> vector<8x256xf32>
    %65 = vector.broadcast %35 : vector<1x256xf32> to vector<8x256xf32>
    %66 = arith.mulf %64, %65 : vector<8x256xf32>
    %c248_i32_25 = arith.constant 248 : i32
    %67 = tpu.dynamic_rotate %63 by %c248_i32_25 dim 1 : vector<8x256xf32>, i32 -> vector<8x256xf32>
    %68 = vector.broadcast %37 : vector<1x256xf32> to vector<8x256xf32>
    %69 = arith.mulf %67, %68 : vector<8x256xf32>
    %70 = tpu.concatenate %66, %63, %69 in 0 : vector<8x256xf32>, vector<8x256xf32>, vector<8x256xf32> -> vector<24x256xf32>
    %c24 = arith.constant 24 : index
    %c0_26 = arith.constant 0 : index
    %71 = vector.load %arg10[%c24, %c0_26] : memref<144x256xf32, #tpu.memory_space<vmem>>, vector<24x256xf32>
    tpu.vector_store %arg10[%c24, %c0_26], %70 {strides = array<i32>} : memref<144x256xf32, #tpu.memory_space<vmem>>, vector<24x256xf32>,
    %c1_i32_27 = arith.constant 1 : i32
    %72 = tpu.dynamic_rotate %70 by %c1_i32_27 dim 1 : vector<24x256xf32>, i32 -> vector<24x256xf32>
    %73 = vector.broadcast %39 : vector<1x256xf32> to vector<24x256xf32>
    %74 = arith.mulf %72, %73 : vector<24x256xf32>
    %c0_28 = arith.constant 0 : index
    %c0_29 = arith.constant 0 : index
    %75 = vector.load %arg10[%c0_28, %c0_29] : memref<144x256xf32, #tpu.memory_space<vmem>>, vector<24x256xf32>
    tpu.vector_store %arg10[%c0_28, %c0_29], %74 {strides = array<i32>} : memref<144x256xf32, #tpu.memory_space<vmem>>, vector<24x256xf32>,
    %c255_i32_30 = arith.constant 255 : i32
    %76 = tpu.dynamic_rotate %70 by %c255_i32_30 dim 1 : vector<24x256xf32>, i32 -> vector<24x256xf32>
    %77 = vector.broadcast %41 : vector<1x256xf32> to vector<24x256xf32>
    %78 = arith.mulf %76, %77 : vector<24x256xf32>
    %c48_31 = arith.constant 48 : index
    %c0_32 = arith.constant 0 : index
    %79 = vector.load %arg10[%c48_31, %c0_32] : memref<144x256xf32, #tpu.memory_space<vmem>>, vector<24x256xf32>
    tpu.vector_store %arg10[%c48_31, %c0_32], %78 {strides = array<i32>} : memref<144x256xf32, #tpu.memory_space<vmem>>, vector<24x256xf32>,
    %c0_33 = arith.constant 0 : index
    %c0_34 = arith.constant 0 : index
    %80 = vector.load %arg7[%c0_33, %c0_34] : memref<8x72xf32, #tpu.memory_space<vmem>>, vector<8x72xf32>
    %c0_35 = arith.constant 0 : index
    %c0_36 = arith.constant 0 : index
    %81 = vector.load %arg10[%c0_35, %c0_36] : memref<144x256xf32, #tpu.memory_space<vmem>>, vector<72x256xf32>
    %cst_37 = arith.constant dense<0.000000e+00> : vector<8x256xf32>
    %82 = tpu.matmul %80, %81, %cst_37 {dimension_numbers = #tpu.dot_dimension_numbers<[1], [0], [0], [1], [0, 0, 1, 1], [], []>} : vector<8x72xf32>, vector<72x256xf32>, vector<8x256xf32> -> vector<8x256xf32>
    %c0_38 = arith.constant 0 : index
    %c0_39 = arith.constant 0 : index
    %83 = vector.load %arg8[%c0_38, %c0_39] : memref<8x1xf32, #tpu.memory_space<vmem>>, vector<8x1xf32>
    %84 = vector.broadcast %83 : vector<8x1xf32> to vector<8x256xf32>
    %85 = arith.addf %82, %84 : vector<8x256xf32>
    %86 = vector.extract_strided_slice %85 {offsets = [0, 0], sizes = [8, 128], strides = [1, 1]} : vector<8x256xf32> to vector<8x128xf32>
    %c0_40 = arith.constant 0 : index
    %c0_41 = arith.constant 0 : index
    %c0_42 = arith.constant 0 : index
    %87 = vector.load %arg9[%c0_40, %c0_41, %c0_42] : memref<2x8x128xf32, #tpu.memory_space<vmem>>, vector<1x8x128xf32>
    %88 = vector.shape_cast %87 : vector<1x8x128xf32> to vector<8x128xf32>
    %89 = vector.shape_cast %86 : vector<8x128xf32> to vector<1x8x128xf32>
    tpu.vector_store %arg9[%c0_40, %c0_41, %c0_42], %89 {strides = array<i32>} : memref<2x8x128xf32, #tpu.memory_space<vmem>>, vector<1x8x128xf32>,
    %90 = vector.extract_strided_slice %85 {offsets = [0, 128], sizes = [8, 128], strides = [1, 1]} : vector<8x256xf32> to vector<8x128xf32>
    %c1_43 = arith.constant 1 : index
    %c0_44 = arith.constant 0 : index
    %c0_45 = arith.constant 0 : index
    %91 = vector.load %arg9[%c1_43, %c0_44, %c0_45] : memref<2x8x128xf32, #tpu.memory_space<vmem>>, vector<1x8x128xf32>
    %92 = vector.shape_cast %91 : vector<1x8x128xf32> to vector<8x128xf32>
    %93 = vector.shape_cast %90 : vector<8x128xf32> to vector<1x8x128xf32>
    tpu.vector_store %arg9[%c1_43, %c0_44, %c0_45], %93 {strides = array<i32>} : memref<2x8x128xf32, #tpu.memory_space<vmem>>, vector<1x8x128xf32>,
    return
  }
  func.func @transform_0(%arg0: i32) -> (i32, i32, i32) {
    %c0_i32 = arith.constant 0 : i32
    %c0_i32_0 = arith.constant 0 : i32
    %c0_i32_1 = arith.constant 0 : i32
    return %arg0, %c0_i32, %c0_i32_0 : i32, i32, i32
  }
  func.func @transform_1(%arg0: i32) -> (i32, i32) {
    %c0_i32 = arith.constant 0 : i32
    %c0_i32_0 = arith.constant 0 : i32
    %c0_i32_1 = arith.constant 0 : i32
    return %c0_i32, %c0_i32_0 : i32, i32
  }
  func.func @transform_2(%arg0: i32) -> (i32, i32) {
    %c0_i32 = arith.constant 0 : i32
    %c0_i32_0 = arith.constant 0 : i32
    %c0_i32_1 = arith.constant 0 : i32
    return %c0_i32, %c0_i32_0 : i32, i32
  }
  func.func @transform_3(%arg0: i32) -> (i32, i32) {
    %c0_i32 = arith.constant 0 : i32
    %c0_i32_0 = arith.constant 0 : i32
    %c0_i32_1 = arith.constant 0 : i32
    return %c0_i32, %c0_i32_0 : i32, i32
  }
  func.func @transform_4(%arg0: i32) -> (i32, i32) {
    %c0_i32 = arith.constant 0 : i32
    %c0_i32_0 = arith.constant 0 : i32
    %c0_i32_1 = arith.constant 0 : i32
    return %c0_i32, %c0_i32_0 : i32, i32
  }
  func.func @transform_5(%arg0: i32) -> (i32, i32) {
    %c0_i32 = arith.constant 0 : i32
    %c0_i32_0 = arith.constant 0 : i32
    %c0_i32_1 = arith.constant 0 : i32
    return %c0_i32, %c0_i32_0 : i32, i32
  }
  func.func @transform_6(%arg0: i32) -> (i32, i32) {
    %c0_i32 = arith.constant 0 : i32
    %c0_i32_0 = arith.constant 0 : i32
    %c0_i32_1 = arith.constant 0 : i32
    return %c0_i32, %c0_i32_0 : i32, i32
  }
  func.func @transform_7(%arg0: i32) -> (i32, i32) {
    %c0_i32 = arith.constant 0 : i32
    %c0_i32_0 = arith.constant 0 : i32
    %c0_i32_1 = arith.constant 0 : i32
    return %c0_i32, %c0_i32_0 : i32, i32
  }
  func.func @transform_8(%arg0: i32) -> (i32, i32, i32) {
    %c0_i32 = arith.constant 0 : i32
    %c0_i32_0 = arith.constant 0 : i32
    %c0_i32_1 = arith.constant 0 : i32
    return %arg0, %c0_i32, %c0_i32_0 : i32, i32, i32
  }
}

</mosaic_0001>

<llo_original>
// kernel: tile.13
$region0: #{tile.13}
  #allocation0 [shape = 's32[1]{0}', space=sflag, size = 0x4, scoped, tag = 'scoped memory for tile.13']
  %s0 = inlined_call_operand.vmem [shape: f32[2], index: 0, kind: input, shape index: {}]
  %s1 = inlined_call_operand.vmem [shape: f32[8,2], index: 1, kind: output, shape index: {}]
  // Predicated region
  $region2: #{tile.13} parent=0 // pred_check
    _
  $region3: #{tile.13} parent=0 // pred_check_branch
    %3 = sbr.rel (0) target = $region5
  $region4: #{tile.13} parent=0 // pred_region
    _
  $region5: #{tile.13} parent=0 // pred_fallthru
    _
  %v4 = vld [vmem:[%s0] ss:$0 sm:$0xff]
  %5 = vst [vmem:[%s1] sm:$0xff] %v4

// kernel: tile.0
$region0: #{tile.0}
  %s0 = inlined_call_operand.vmem [shape: f32[8,2], index: 0, kind: input, shape index: {}]
  %s1 = inlined_call_operand.hbm [shape: f32[16,1], index: 1, kind: output, shape index: {}]
  $region1: #{tile.0} parent=0
    #allocation0 [shape = 'u8[8192]{0}', space=vmem, size = 0x2000, scoped, tag = 'operand span for operand 1']
    #allocation1 [shape = 's32[1]{0}', space=sflag, size = 0x4, scoped, tag = 'scoped memory for tile.0']
    %2 = vsyncpa [#allocation1], 0
    %v3 = vld [vmem:[%s0] sm:$0xff]
    %vm4 = vcmask 7168
    %5 = vst.msk [vmem:[#allocation0] ss:$2 sm:$0xff] %vm4, %v3
    %v6 = vld [vmem:[%s0] sm:$0xff]
    %7 = vrot.lane.b32.xlu0 %v6, 127
    %v8 = vpop.permute.xlu0 %7
    %vm9 = vcmask 7168
    %s10 = scalar_lea.vmem [#allocation0], 1
    %11 = vst.msk [vmem:[%s10] ss:$2 sm:$0xff] %vm9, %v8
    %s13 = ssub.s32 256, 256
    %14 = vsyncadd [#allocation1], %s13
    %s16 = sshll.u32 [#allocation0], 4
    %s17 = int_to_ptr.vmem [resolvable:$true] %s16
    %19 = dma.vmem_to_hbm [thread:$0]  %s17, 256, %s1, [#allocation1]
    %20 = dma.done [#allocation1], 256
    %21 = vsyncpa [#allocation1], 1

// kernel: down_pixel_w_pos.1
$region0: #{down_pixel_w_pos.1}
  #allocation0 [shape = 'u32[]', space=smem, size = 0x4, offset = 0x4, fixed_abs, tag = 'smem constant byte address 0x4 - core index']
  #allocation1 [shape = 'u32[144,128]{1,0:T(1,128)}', space=vmem, size = 0x12000, scoped, tag = 'internal scratch']
  #allocation2 [shape = 'f32[144,256]{1,0:T(8,128)}', space=vmem, size = 0x24000, scoped, tag = 'scratch operand']
  %s0 = inlined_call_operand.hbm [shape: f32[2,16,128], index: 0, kind: input, shape index: {}]
  %s1 = inlined_call_operand.hbm [shape: f32[16,1], index: 1, kind: input, shape index: {}]
  %s2 = inlined_call_operand.hbm [shape: f32[1,128], index: 2, kind: input, shape index: {}]
  %s3 = inlined_call_operand.hbm [shape: f32[4,128], index: 3, kind: input, shape index: {}]
  %s4 = inlined_call_operand.hbm [shape: f32[8,144], index: 4, kind: input, shape index: {}]
  %s5 = inlined_call_operand.hbm [shape: f32[8,128], index: 5, kind: input, shape index: {}]
  %s6 = inlined_call_operand.hbm [shape: f32[8,72], index: 6, kind: input, shape index: {}]
  %s7 = inlined_call_operand.hbm [shape: f32[8,1], index: 7, kind: input, shape index: {}]
  %s8 = inlined_call_operand.hbm [shape: f32[2,8,128], index: 8, kind: output, shape index: {}]
  %s9 = sld [smem:[#allocation0]]
  $region74: #{down_pixel_w_pos.1} parent=0
    _
  %s11 = ssub.s32 1, %s9
  %s12 = scalar_select 0, %s11, %s9
  $region1: #{down_pixel_w_pos.1} parent=0
    #allocation3 [shape = 'u8[16384]{0}', space=vmem, size = 0x4000, scoped, tag = 'input window, operand 0, single buffered']
    #allocation4 [shape = 's32[1]{0}', space=sflag, size = 0x4, scoped, tag = 'scoped memory for down_pixel_w_pos.1']
    #allocation5 [shape = 's32[1]{0}', space=sflag, size = 0x4, scoped, tag = 'scoped memory for down_pixel_w_pos.1']
    #allocation6 [shape = 'u8[8192]{0}', space=vmem, size = 0x2000, scoped, tag = 'input window, operand 1, single buffered']
    #allocation7 [shape = 's32[1]{0}', space=sflag, size = 0x4, scoped, tag = 'scoped memory for down_pixel_w_pos.1']
    #allocation8 [shape = 'u8[512]{0}', space=vmem, size = 0x400, scoped, tag = 'input window, operand 2, single buffered']
    #allocation9 [shape = 'u8[2048]{0}', space=vmem, size = 0x800, scoped, tag = 'input window, operand 3, single buffered']
    #allocation10 [shape = 's32[1]{0}', space=sflag, size = 0x4, scoped, tag = 'scoped memory for down_pixel_w_pos.1']
    #allocation11 [shape = 'u8[8192]{0}', space=vmem, size = 0x2000, scoped, tag = 'input window, operand 4, single buffered']
    #allocation12 [shape = 'u8[4096]{0}', space=vmem, size = 0x1000, scoped, tag = 'input window, operand 5, single buffered']
    #allocation13 [shape = 's32[1]{0}', space=sflag, size = 0x4, scoped, tag = 'scoped memory for down_pixel_w_pos.1']
    #allocation14 [shape = 'u8[4096]{0}', space=vmem, size = 0x1000, scoped, tag = 'input window, operand 6, single buffered']
    #allocation15 [shape = 'u8[4096]{0}', space=vmem, size = 0x1000, scoped, tag = 'input window, operand 7, single buffered']
    #allocation16 [shape = 's32[1]{0}', space=sflag, size = 0x4, scoped, tag = 'scoped memory for down_pixel_w_pos.1']
    #allocation17 [shape = 'u8[8192]{0}', space=vmem, size = 0x2000, scoped, tag = 'output window, operand 0, single buffered']
    %13 = vsyncpa [#allocation4], 0
    %14 = vsyncpa [#allocation7], 0
    %15 = vsyncpa [#allocation10], 0
    %16 = vsyncpa [#allocation13], 0
    %17 = vsyncpa [#allocation16], 0
    %18 = vsyncpa [#allocation5], 0
    // Predicated region
    $region2: #{down_pixel_w_pos.1} parent=1 // pred_check
      _
    $region3: #{down_pixel_w_pos.1} parent=1 // pred_check_branch
      %20 = sbr.rel (0) target = $region5
    $region4: #{down_pixel_w_pos.1} parent=1 // pred_region
      %s22 = ssub.s32 512, 512
      %23 = vsyncadd [#allocation4], %s22
      %s24 = sshll.u32 [#allocation3], 4
      %s25 = int_to_ptr.vmem [resolvable:$true] %s24
      %30 = dma.hbm_to_vmem [thread:$0]  %s0, 512, %s25, [#allocation4], 128, 128, 8
    $region5: #{down_pixel_w_pos.1} parent=1 // pred_fallthru
      _
    // Predicated region
    $region6: #{down_pixel_w_pos.1} parent=1 // pred_check
      _
    $region7: #{down_pixel_w_pos.1} parent=1 // pred_check_branch
      %32 = sbr.rel (0) target = $region9
    $region8: #{down_pixel_w_pos.1} parent=1 // pred_region
      %s34 = ssub.s32 256, 256
      %35 = vsyncadd [#allocation7], %s34
      %s36 = sshll.u32 [#allocation6], 4
      %s37 = int_to_ptr.vmem [resolvable:$true] %s36
      %42 = dma.hbm_to_vmem [thread:$0]  %s1, 256, %s37, [#allocation7], 128, 128, 8
    $region9: #{down_pixel_w_pos.1} parent=1 // pred_fallthru
      _
    // Predicated region
    $region10: #{down_pixel_w_pos.1} parent=1 // pred_check
      _
    $region11: #{down_pixel_w_pos.1} parent=1 // pred_check_branch
      %44 = sbr.rel (0) target = $region13
    $region12: #{down_pixel_w_pos.1} parent=1 // pred_region
      %s46 = ssub.s32 16, 16
      %47 = vsyncadd [#allocation7], %s46
      %s49 = sshll.u32 [#allocation8], 4
      %s50 = int_to_ptr.vmem [resolvable:$true] %s49
      %52 = dma.hbm_to_vmem [thread:$0]  %s2, 16, %s50, [#allocation7]
    $region13: #{down_pixel_w_pos.1} parent=1 // pred_fallthru
      _
    // Predicated region
    $region14: #{down_pixel_w_pos.1} parent=1 // pred_check
      _
    $region15: #{down_pixel_w_pos.1} parent=1 // pred_check_branch
      %54 = sbr.rel (0) target = $region17
    $region16: #{down_pixel_w_pos.1} parent=1 // pred_region
      %s56 = ssub.s32 64, 64
      %57 = vsyncadd [#allocation10], %s56
      %s59 = sshll.u32 [#allocation9], 4
      %s60 = int_to_ptr.vmem [resolvable:$true] %s59
      %62 = dma.hbm_to_vmem [thread:$0]  %s3, 64, %s60, [#allocation10]
    $region17: #{down_pixel_w_pos.1} parent=1 // pred_fallthru
      _
    // Predicated region
    $region18: #{down_pixel_w_pos.1} parent=1 // pred_check
      _
    $region19: #{down_pixel_w_pos.1} parent=1 // pred_check_branch
      %64 = sbr.rel (0) target = $region21
    $region20: #{down_pixel_w_pos.1} parent=1 // pred_region
      %s66 = ssub.s32 256, 256
      %67 = vsyncadd [#allocation10], %s66
      %s69 = sshll.u32 [#allocation11], 4
      %s70 = int_to_ptr.vmem [resolvable:$true] %s69
      %72 = dma.hbm_to_vmem [thread:$0]  %s4, 256, %s70, [#allocation10]
    $region21: #{down_pixel_w_pos.1} parent=1 // pred_fallthru
      _
    // Predicated region
    $region22: #{down_pixel_w_pos.1} parent=1 // pred_check
      _
    $region23: #{down_pixel_w_pos.1} parent=1 // pred_check_branch
      %74 = sbr.rel (0) target = $region25
    $region24: #{down_pixel_w_pos.1} parent=1 // pred_region
      %s76 = ssub.s32 128, 128
      %77 = vsyncadd [#allocation13], %s76
      %s79 = sshll.u32 [#allocation12], 4
      %s80 = int_to_ptr.vmem [resolvable:$true] %s79
      %82 = dma.hbm_to_vmem [thread:$0]  %s5, 128, %s80, [#allocation13]
    $region25: #{down_pixel_w_pos.1} parent=1 // pred_fallthru
      _
    // Predicated region
    $region26: #{down_pixel_w_pos.1} parent=1 // pred_check
      _
    $region27: #{down_pixel_w_pos.1} parent=1 // pred_check_branch
      %84 = sbr.rel (0) target = $region29
    $region28: #{down_pixel_w_pos.1} parent=1 // pred_region
      %s86 = ssub.s32 128, 128
      %87 = vsyncadd [#allocation13], %s86
      %s89 = sshll.u32 [#allocation14], 4
      %s90 = int_to_ptr.vmem [resolvable:$true] %s89
      %92 = dma.hbm_to_vmem [thread:$0]  %s6, 128, %s90, [#allocation13]
    $region29: #{down_pixel_w_pos.1} parent=1 // pred_fallthru
      _
    // Predicated region
    $region30: #{down_pixel_w_pos.1} parent=1 // pred_check
      _
    $region31: #{down_pixel_w_pos.1} parent=1 // pred_check_branch
      %94 = sbr.rel (0) target = $region33
    $region32: #{down_pixel_w_pos.1} parent=1 // pred_region
      %s96 = ssub.s32 128, 128
      %97 = vsyncadd [#allocation16], %s96
      %s99 = sshll.u32 [#allocation15], 4
      %s100 = int_to_ptr.vmem [resolvable:$true] %s99
      %102 = dma.hbm_to_vmem [thread:$0]  %s7, 128, %s100, [#allocation16]
    $region33: #{down_pixel_w_pos.1} parent=1 // pred_fallthru
      _
    // Predicated region
    $region34: #{down_pixel_w_pos.1} parent=1 // pred_check
      _
    $region35: #{down_pixel_w_pos.1} parent=1 // pred_check_branch
      %104 = sbr.rel (0) target = $region37
    $region36: #{down_pixel_w_pos.1} parent=1 // pred_region
      %105 = dma.done [#allocation4], 512
    $region37: #{down_pixel_w_pos.1} parent=1 // pred_fallthru
      _
    // Predicated region
    $region38: #{down_pixel_w_pos.1} parent=1 // pred_check
      _
    $region39: #{down_pixel_w_pos.1} parent=1 // pred_check_branch
      %107 = sbr.rel (0) target = $region41
    $region40: #{down_pixel_w_pos.1} parent=1 // pred_region
      %108 = dma.done [#allocation7], 256
    $region41: #{down_pixel_w_pos.1} parent=1 // pred_fallthru
      _
    // Predicated region
    $region42: #{down_pixel_w_pos.1} parent=1 // pred_check
      _
    $region43: #{down_pixel_w_pos.1} parent=1 // pred_check_branch
      %110 = sbr.rel (0) target = $region45
    $region44: #{down_pixel_w_pos.1} parent=1 // pred_region
      %111 = dma.done [#allocation7], 16
    $region45: #{down_pixel_w_pos.1} parent=1 // pred_fallthru
      _
    // Predicated region
    $region46: #{down_pixel_w_pos.1} parent=1 // pred_check
      _
    $region47: #{down_pixel_w_pos.1} parent=1 // pred_check_branch
      %113 = sbr.rel (0) target = $region49
    $region48: #{down_pixel_w_pos.1} parent=1 // pred_region
      %114 = dma.done [#allocation10], 64
    $region49: #{down_pixel_w_pos.1} parent=1 // pred_fallthru
      _
    // Predicated region
    $region50: #{down_pixel_w_pos.1} parent=1 // pred_check
      _
    $region51: #{down_pixel_w_pos.1} parent=1 // pred_check_branch
      %116 = sbr.rel (0) target = $region53
    $region52: #{down_pixel_w_pos.1} parent=1 // pred_region
      %117 = dma.done [#allocation10], 256
    $region53: #{down_pixel_w_pos.1} parent=1 // pred_fallthru
      _
    // Predicated region
    $region54: #{down_pixel_w_pos.1} parent=1 // pred_check
      _
    $region55: #{down_pixel_w_pos.1} parent=1 // pred_check_branch
      %119 = sbr.rel (0) target = $region57
    $region56: #{down_pixel_w_pos.1} parent=1 // pred_region
      %120 = dma.done [#allocation13], 128
    $region57: #{down_pixel_w_pos.1} parent=1 // pred_fallthru
      _
    // Predicated region
    $region58: #{down_pixel_w_pos.1} parent=1 // pred_check
      _
    $region59: #{down_pixel_w_pos.1} parent=1 // pred_check_branch
      %122 = sbr.rel (0) target = $region61
    $region60: #{down_pixel_w_pos.1} parent=1 // pred_region
      %123 = dma.done [#allocation13], 128
    $region61: #{down_pixel_w_pos.1} parent=1 // pred_fallthru
      _
    // Predicated region
    $region62: #{down_pixel_w_pos.1} parent=1 // pred_check
      _
    $region63: #{down_pixel_w_pos.1} parent=1 // pred_check_branch
      %125 = sbr.rel (0) target = $region65
    $region64: #{down_pixel_w_pos.1} parent=1 // pred_region
      %126 = dma.done [#allocation16], 128
    $region65: #{down_pixel_w_pos.1} parent=1 // pred_fallthru
      _
    %v127 = vld [vmem:[#allocation6] sm:$0xff]
    %v128 = vld [vmem:[#allocation6 + $0x8] sm:$0xff]
    %v129 = vld [vmem:[#allocation8] sm:$0x1]
    %v130 = vld [vmem:[#allocation3] sm:$0xff]
    %v131 = vld [vmem:[#allocation3 + $0x8] sm:$0xff]
    %133 = vset.pattern.permute.xlu0 0
    %134 = vperm.xlu0 %133, %v127
    %v135 = vpop.permute.xlu0 %134
    %138 = vset.pattern.permute.xlu0 0
    %139 = vperm.xlu0 %138, %v128
    %v140 = vpop.permute.xlu0 %139
    %v142 = vadd.f32 %v130, %v135
    %v143 = vadd.f32 %v131, %v140
    %v145 = vlaneseq
    %v146 = vshrl.u32 %v145, 7
    %v147 = vsub.s32 0, %v146
    %v148 = vrot.slane %v129, %v147
    %v150 = vmul.f32 %v142, %v148
    %v151 = vmul.f32 %v143, %v148
    %152 = vadd.xlane.f32.xlu0 %v150
    %v153 = vpop.xlane.xlu0 %152
    %154 = vadd.xlane.f32.xlu0 %v151
    %v155 = vpop.xlane.xlu0 %154
    %v156 = vxor.u32 %v153, 2147483648
    %v157 = vxor.u32 %v155, 2147483648
    %v158 = vmul.f32 %v156, 1.442695
    %v159 = vpow.pop %v158
    %v160 = vmul.f32 %v157, 1.442695
    %v161 = vpow.pop %v160
    %v162 = vadd.f32 %v159, 1.0
    %v163 = vadd.f32 %v161, 1.0
    %v164 = vrcp.pop %v162
    %v165 = vmul.f32 1.0, %v164
    %v166 = vrcp.pop %v163
    %v167 = vmul.f32 1.0, %v166
    %v168 = vmul.f32 %v142, %v165
    %v169 = vmul.f32 %v143, %v167
    %s170 = scalar_lea.vmem [#allocation3], 16
    %v171 = vld [vmem:[%s170] sm:$0xff]
    %v172 = vld [vmem:[%s170 + $0x8] sm:$0xff]
    %v173 = vadd.f32 %v171, %v135
    %v174 = vadd.f32 %v172, %v140
    %v175 = vmul.f32 %v173, %v148
    %v176 = vmul.f32 %v174, %v148
    %177 = vadd.xlane.f32.xlu0 %v175
    %v178 = vpop.xlane.xlu0 %177
    %179 = vadd.xlane.f32.xlu0 %v176
    %v180 = vpop.xlane.xlu0 %179
    %v181 = vxor.u32 %v178, 2147483648
    %v182 = vxor.u32 %v180, 2147483648
    %v183 = vmul.f32 %v181, 1.442695
    %v184 = vpow.pop %v183
    %v185 = vmul.f32 %v182, 1.442695
    %v186 = vpow.pop %v185
    %v187 = vadd.f32 %v184, 1.0
    %v188 = vadd.f32 %v186, 1.0
    %v189 = vrcp.pop %v187
    %v190 = vmul.f32 1.0, %v189
    %v191 = vrcp.pop %v188
    %v192 = vmul.f32 1.0, %v191
    %v193 = vmul.f32 %v173, %v190
    %v194 = vmul.f32 %v174, %v192
    %v195 = vld [vmem:[#allocation9] sm:$0xf]
    %196 = vrot.lane.b32.xlu0 %v168, 8
    %v197 = vpop.permute.xlu0 %196
    %198 = vrot.lane.b32.xlu0 %v169, 8
    %v199 = vpop.permute.xlu0 %198
    %200 = vrot.lane.b32.xlu0 %v193, 8
    %v201 = vpop.permute.xlu0 %200
    %202 = vrot.lane.b32.xlu0 %v194, 8
    %v203 = vpop.permute.xlu0 %202
    %v204 = vlaneseq
    %v205 = vand.u32 %v204, 127
    %vm206 = vcmp.lt.s32.totalorder %v205, 8
    %v207 = vsel %vm206, %v197, %v201
    %v208 = vsel %vm206, %v199, %v203
    %v209 = vsel %vm206, %v201, %v197
    %v210 = vsel %vm206, %v203, %v199
    %v211 = vlaneseq
    %v212 = vshrl.u32 %v211, 7
    %v213 = vsub.s32 0, %v212
    %v214 = vrot.slane %v195, %v213
    %v215 = vmul.f32 %v209, %v214
    %v216 = vmul.f32 %v207, %v214
    %v217 = vmul.f32 %v210, %v214
    %v218 = vmul.f32 %v208, %v214
    %219 = vrot.lane.b32.xlu0 %v168, 120
    %v220 = vpop.permute.xlu0 %219
    %221 = vrot.lane.b32.xlu0 %v169, 120
    %v222 = vpop.permute.xlu0 %221
    %223 = vrot.lane.b32.xlu0 %v193, 120
    %v224 = vpop.permute.xlu0 %223
    %225 = vrot.lane.b32.xlu0 %v194, 120
    %v226 = vpop.permute.xlu0 %225
    %vm227 = vcmp.lt.s32.totalorder %v205, 120
    %v228 = vsel %vm227, %v220, %v224
    %v229 = vsel %vm227, %v222, %v226
    %v230 = vsel %vm227, %v224, %v220
    %v231 = vsel %vm227, %v226, %v222
    %v232 = vlaneseq
    %v233 = vshrl.u32 %v232, 7
    %v234 = vsub.s32 1, %v233
    %v235 = vrot.slane %v195, %v234
    %v236 = vmul.f32 %v228, %v235
    %v237 = vmul.f32 %v230, %v235
    %v238 = vmul.f32 %v229, %v235
    %v239 = vmul.f32 %v231, %v235
    %240 = vst [vmem:[#allocation2 + $0x60] sm:$0xff] %v215
    %241 = vst [vmem:[#allocation2 + $0x68] sm:$0xff] %v216
    %242 = vst [vmem:[#allocation2 + $0x70] sm:$0xff] %v217
    %243 = vst [vmem:[#allocation2 + $0x78] sm:$0xff] %v218
    %244 = vst [vmem:[#allocation2 + $0x80] sm:$0xff] %v168
    %245 = vst [vmem:[#allocation2 + $0x88] sm:$0xff] %v193
    %246 = vst [vmem:[#allocation2 + $0x90] sm:$0xff] %v169
    %247 = vst [vmem:[#allocation2 + $0x98] sm:$0xff] %v194
    %248 = vst [vmem:[#allocation2 + $0xa0] sm:$0xff] %v236
    %249 = vst [vmem:[#allocation2 + $0xa8] sm:$0xff] %v237
    %250 = vst [vmem:[#allocation2 + $0xb0] sm:$0xff] %v238
    %251 = vst [vmem:[#allocation2 + $0xb8] sm:$0xff] %v239
    %252 = vrot.lane.b32.xlu0 %v215, 1
    %v253 = vpop.permute.xlu0 %252
    %254 = vrot.lane.b32.xlu0 %v217, 1
    %v255 = vpop.permute.xlu0 %254
    %256 = vrot.lane.b32.xlu0 %v168, 1
    %v257 = vpop.permute.xlu0 %256
    %258 = vrot.lane.b32.xlu0 %v169, 1
    %v259 = vpop.permute.xlu0 %258
    %260 = vrot.lane.b32.xlu0 %v236, 1
    %v261 = vpop.permute.xlu0 %260
    %262 = vrot.lane.b32.xlu0 %v238, 1
    %v263 = vpop.permute.xlu0 %262
    %264 = vrot.lane.b32.xlu0 %v216, 1
    %v265 = vpop.permute.xlu0 %264
    %266 = vrot.lane.b32.xlu0 %v218, 1
    %v267 = vpop.permute.xlu0 %266
    %268 = vrot.lane.b32.xlu0 %v193, 1
    %v269 = vpop.permute.xlu0 %268
    %270 = vrot.lane.b32.xlu0 %v194, 1
    %v271 = vpop.permute.xlu0 %270
    %272 = vrot.lane.b32.xlu0 %v237, 1
    %v273 = vpop.permute.xlu0 %272
    %274 = vrot.lane.b32.xlu0 %v239, 1
    %v275 = vpop.permute.xlu0 %274
    %vm276 = vcmp.lt.s32.totalorder %v205, 1
    %v277 = vsel %vm276, %v253, %v265
    %v278 = vsel %vm276, %v255, %v267
    %v279 = vsel %vm276, %v257, %v269
    %v280 = vsel %vm276, %v259, %v271
    %v281 = vsel %vm276, %v261, %v273
    %v282 = vsel %vm276, %v263, %v275
    %v283 = vsel %vm276, %v265, %v253
    %v284 = vsel %vm276, %v267, %v255
    %v285 = vsel %vm276, %v269, %v257
    %v286 = vsel %vm276, %v271, %v259
    %v287 = vsel %vm276, %v273, %v261
    %v288 = vsel %vm276, %v275, %v263
    %v289 = vlaneseq
    %v290 = vshrl.u32 %v289, 7
    %v291 = vsub.s32 2, %v290
    %v292 = vrot.slane %v195, %v291
    %v293 = vmul.f32 %v283, %v292
    %v294 = vmul.f32 %v277, %v292
    %v295 = vmul.f32 %v284, %v292
    %v296 = vmul.f32 %v278, %v292
    %v297 = vmul.f32 %v285, %v292
    %v298 = vmul.f32 %v279, %v292
    %v299 = vmul.f32 %v286, %v292
    %v300 = vmul.f32 %v280, %v292
    %v301 = vmul.f32 %v287, %v292
    %v302 = vmul.f32 %v281, %v292
    %v303 = vmul.f32 %v288, %v292
    %v304 = vmul.f32 %v282, %v292
    %305 = vst [vmem:[#allocation2] sm:$0xff] %v293
    %306 = vst [vmem:[#allocation2 + $0x8] sm:$0xff] %v294
    %307 = vst [vmem:[#allocation2 + $0x10] sm:$0xff] %v295
    %308 = vst [vmem:[#allocation2 + $0x18] sm:$0xff] %v296
    %309 = vst [vmem:[#allocation2 + $0x20] sm:$0xff] %v297
    %310 = vst [vmem:[#allocation2 + $0x28] sm:$0xff] %v298
    %311 = vst [vmem:[#allocation2 + $0x30] sm:$0xff] %v299
    %312 = vst [vmem:[#allocation2 + $0x38] sm:$0xff] %v300
    %313 = vst [vmem:[#allocation2 + $0x40] sm:$0xff] %v301
    %314 = vst [vmem:[#allocation2 + $0x48] sm:$0xff] %v302
    %315 = vst [vmem:[#allocation2 + $0x50] sm:$0xff] %v303
    %316 = vst [vmem:[#allocation2 + $0x58] sm:$0xff] %v304
    %317 = vrot.lane.b32.xlu0 %v215, 127
    %v318 = vpop.permute.xlu0 %317
    %319 = vrot.lane.b32.xlu0 %v217, 127
    %v320 = vpop.permute.xlu0 %319
    %321 = vrot.lane.b32.xlu0 %v168, 127
    %v322 = vpop.permute.xlu0 %321
    %323 = vrot.lane.b32.xlu0 %v169, 127
    %v324 = vpop.permute.xlu0 %323
    %325 = vrot.lane.b32.xlu0 %v236, 127
    %v326 = vpop.permute.xlu0 %325
    %327 = vrot.lane.b32.xlu0 %v238, 127
    %v328 = vpop.permute.xlu0 %327
    %329 = vrot.lane.b32.xlu0 %v216, 127
    %v330 = vpop.permute.xlu0 %329
    %331 = vrot.lane.b32.xlu0 %v218, 127
    %v332 = vpop.permute.xlu0 %331
    %333 = vrot.lane.b32.xlu0 %v193, 127
    %v334 = vpop.permute.xlu0 %333
    %335 = vrot.lane.b32.xlu0 %v194, 127
    %v336 = vpop.permute.xlu0 %335
    %337 = vrot.lane.b32.xlu0 %v237, 127
    %v338 = vpop.permute.xlu0 %337
    %339 = vrot.lane.b32.xlu0 %v239, 127
    %v340 = vpop.permute.xlu0 %339
    %vm341 = vcmp.lt.s32.totalorder %v205, 127
    %v342 = vsel %vm341, %v318, %v330
    %v343 = vsel %vm341, %v320, %v332
    %v344 = vsel %vm341, %v322, %v334
    %v345 = vsel %vm341, %v324, %v336
    %v346 = vsel %vm341, %v326, %v338
    %v347 = vsel %vm341, %v328, %v340
    %v348 = vsel %vm341, %v330, %v318
    %v349 = vsel %vm341, %v332, %v320
    %v350 = vsel %vm341, %v334, %v322
    %v351 = vsel %vm341, %v336, %v324
    %v352 = vsel %vm341, %v338, %v326
    %v353 = vsel %vm341, %v340, %v328
    %v354 = vlaneseq
    %v355 = vshrl.u32 %v354, 7
    %v356 = vsub.s32 3, %v355
    %v357 = vrot.slane %v195, %v356
    %v358 = vmul.f32 %v342, %v357
    %v359 = vmul.f32 %v348, %v357
    %v360 = vmul.f32 %v343, %v357
    %v361 = vmul.f32 %v349, %v357
    %v362 = vmul.f32 %v344, %v357
    %v363 = vmul.f32 %v350, %v357
    %v364 = vmul.f32 %v345, %v357
    %v365 = vmul.f32 %v351, %v357
    %v366 = vmul.f32 %v346, %v357
    %v367 = vmul.f32 %v352, %v357
    %v368 = vmul.f32 %v347, %v357
    %v369 = vmul.f32 %v353, %v357
    %370 = vst [vmem:[#allocation2 + $0xc0] sm:$0xff] %v358
    %371 = vst [vmem:[#allocation2 + $0xc8] sm:$0xff] %v359
    %372 = vst [vmem:[#allocation2 + $0xd0] sm:$0xff] %v360
    %373 = vst [vmem:[#allocation2 + $0xd8] sm:$0xff] %v361
    %374 = vst [vmem:[#allocation2 + $0xe0] sm:$0xff] %v362
    %375 = vst [vmem:[#allocation2 + $0xe8] sm:$0xff] %v363
    %376 = vst [vmem:[#allocation2 + $0xf0] sm:$0xff] %v364
    %377 = vst [vmem:[#allocation2 + $0xf8] sm:$0xff] %v365
    %378 = vst [vmem:[#allocation2 + $0x100] sm:$0xff] %v366
    %379 = vst [vmem:[#allocation2 + $0x108] sm:$0xff] %v367
    %380 = vst [vmem:[#allocation2 + $0x110] sm:$0xff] %v368
    %381 = vst [vmem:[#allocation2 + $0x118] sm:$0xff] %v369
    %v382 = vld [vmem:[#allocation11] sm:$0xff]
    %v383 = vld [vmem:[#allocation11 + $0x8] sm:$0xff]
    %v384 = vld [vmem:[#allocation2] sm:$0xff]
    %v385 = vld [vmem:[#allocation2 + $0x8] sm:$0xff]
    %v386 = vld [vmem:[#allocation2 + $0x10] sm:$0xff]
    %v387 = vld [vmem:[#allocation2 + $0x18] sm:$0xff]
    %v388 = vld [vmem:[#allocation2 + $0x20] sm:$0xff]
    %v389 = vld [vmem:[#allocation2 + $0x28] sm:$0xff]
    %v390 = vld [vmem:[#allocation2 + $0x30] sm:$0xff]
    %v391 = vld [vmem:[#allocation2 + $0x38] sm:$0xff]
    %v392 = vld [vmem:[#allocation2 + $0x40] sm:$0xff]
    %v393 = vld [vmem:[#allocation2 + $0x48] sm:$0xff]
    %v394 = vld [vmem:[#allocation2 + $0x50] sm:$0xff]
    %v395 = vld [vmem:[#allocation2 + $0x58] sm:$0xff]
    %v396 = vld [vmem:[#allocation2 + $0x60] sm:$0xff]
    %v397 = vld [vmem:[#allocation2 + $0x68] sm:$0xff]
    %v398 = vld [vmem:[#allocation2 + $0x70] sm:$0xff]
    %v399 = vld [vmem:[#allocation2 + $0x78] sm:$0xff]
    %v400 = vld [vmem:[#allocation2 + $0x80] sm:$0xff]
    %v401 = vld [vmem:[#allocation2 + $0x88] sm:$0xff]
    %v402 = vld [vmem:[#allocation2 + $0x90] sm:$0xff]
    %v403 = vld [vmem:[#allocation2 + $0x98] sm:$0xff]
    %v404 = vld [vmem:[#allocation2 + $0xa0] sm:$0xff]
    %v405 = vld [vmem:[#allocation2 + $0xa8] sm:$0xff]
    %v406 = vld [vmem:[#allocation2 + $0xb0] sm:$0xff]
    %v407 = vld [vmem:[#allocation2 + $0xb8] sm:$0xff]
    %v408 = vld [vmem:[#allocation2 + $0xc0] sm:$0xff]
    %v409 = vld [vmem:[#allocation2 + $0xc8] sm:$0xff]
    %v410 = vld [vmem:[#allocation2 + $0xd0] sm:$0xff]
    %v411 = vld [vmem:[#allocation2 + $0xd8] sm:$0xff]
    %v412 = vld [vmem:[#allocation2 + $0xe0] sm:$0xff]
    %v413 = vld [vmem:[#allocation2 + $0xe8] sm:$0xff]
    %v414 = vld [vmem:[#allocation2 + $0xf0] sm:$0xff]
    %v415 = vld [vmem:[#allocation2 + $0xf8] sm:$0xff]
    %v416 = vld [vmem:[#allocation2 + $0x100] sm:$0xff]
    %v417 = vld [vmem:[#allocation2 + $0x108] sm:$0xff]
    %v418 = vld [vmem:[#allocation2 + $0x110] sm:$0xff]
    %v419 = vld [vmem:[#allocation2 + $0x118] sm:$0xff]
    %v420 = vld [vmem:[#allocation12] sm:$0xff]
    %vm421 = vcmask 130048
    %v423 = vsel %vm421, %v383, 0
    %425 = vmatprep.subr.mxu0 %v385
    %426 = vmatpush1.msra.mxu0 %v384
    %427 = vmatprep.subr.mxu0 %v387
    %428 = vmatpush1.msra.mxu0 %v386
    %429 = vmatprep.subr.mxu0 %v389
    %430 = vmatpush1.msra.mxu0 %v388
    %431 = vmatprep.subr.mxu0 %v391
    %432 = vmatpush1.msra.mxu0 %v390
    %433 = vmatprep.subr.mxu0 %v393
    %434 = vmatpush1.msra.mxu0 %v392
    %435 = vmatprep.subr.mxu0 %v395
    %436 = vmatpush1.msra.mxu0 %v394
    %437 = vmatprep.subr.mxu0 %v397
    %438 = vmatpush1.msra.mxu0 %v396
    %439 = vmatprep.subr.mxu0 %v399
    %440 = vmatpush1.msra.mxu0 %v398
    %441 = vmatprep.subr.mxu0 %v401
    %442 = vmatpush1.msra.mxu0 %v400
    %443 = vmatprep.subr.mxu0 %v403
    %444 = vmatpush1.msra.mxu0 %v402
    %445 = vmatprep.subr.mxu0 %v405
    %446 = vmatpush1.msra.mxu0 %v404
    %447 = vmatprep.subr.mxu0 %v407
    %448 = vmatpush1.msra.mxu0 %v406
    %449 = vmatprep.subr.mxu0 %v409
    %450 = vmatpush1.msra.mxu0 %v408
    %451 = vmatprep.subr.mxu0 %v411
    %452 = vmatpush1.msra.mxu0 %v410
    %453 = vmatprep.subr.mxu0 %v413
    %454 = vmatpush1.msra.mxu0 %v412
    %455 = vmatprep.subr.mxu0 %v415
    %456 = vmatpush1.msra.mxu0 %v414
    %457 = vmatprep.subr.mxu0 %v417
    %458 = vmatpush1.msra.mxu0 %v416
    %459 = vmatprep.subr.mxu0 %v419
    %460 = vmatpush1.msra.mxu0 %v418
    %461 = vmatprep.subr.mxu0 0.0
    %462 = vmatpush1.msra.mxu0 0.0
    %463 = vmatprep.subr.mxu0 0.0
    %464 = vmatpush1.msra.mxu0 0.0
    %465 = vmatprep.subr.mxu0 0.0
    %466 = vmatpush1.msra.mxu0 0.0
    %467 = vmatprep.subr.mxu0 0.0
    %468 = vmatpush1.msra.mxu0 0.0
    %469 = vmatprep.subr.mxu0 0.0
    %470 = vmatpush1.msra.mxu0 0.0
    %471 = vmatprep.subr.mxu0 0.0
    %472 = vmatpush1.msra.mxu0 0.0
    %473 = vmatprep.subr.mxu0 0.0
    %474 = vmatpush1.msra.mxu0 0.0
    %475 = vmatprep.subr.mxu0 0.0
    %476 = vmatpush1.msra.mxu0 0.0
    %477 = vmatprep.subr.mxu0 0.0
    %478 = vmatpush1.msra.mxu0 0.0
    %479 = vmatprep.subr.mxu0 0.0
    %480 = vmatpush1.msra.mxu0 0.0
    %481 = vmatprep.subr.mxu0 0.0
    %482 = vmatpush1.msra.mxu0 0.0
    %483 = vmatprep.subr.mxu0 0.0
    %484 = vmatpush1.msra.mxu0 0.0
    %485 = vmatprep.subr.mxu0 0.0
    %486 = vmatpush1.msra.mxu0 0.0
    %487 = vmatprep.subr.mxu0 0.0
    %488 = vmatpush1.msra.mxu0 0.0
    %489 = vmatprep.mubr.f32.mxu0 %v423
    %490 = vmatmul.mubr.f32.gmra.mrb[0].mxu0 %v382
    %v491 = vpop.f32.mrb[0].mxu0
    %v492 = vadd.f32 %v420, %v491
    %v493 = vpop.f32.mrb[0].mxu0
    %v494 = vadd.f32 %v420, %v493
    %495 = vdwg.mxu0
    %496 = vrot.lane.b32.xlu0 %v492, 8
    %v497 = vpop.permute.xlu0 %496
    %498 = vrot.lane.b32.xlu0 %v494, 8
    %v499 = vpop.permute.xlu0 %498
    %v500 = vsel %vm206, %v497, %v499
    %v501 = vsel %vm206, %v499, %v497
    %v502 = vmul.f32 %v501, %v214
    %v503 = vmul.f32 %v500, %v214
    %504 = vrot.lane.b32.xlu0 %v492, 120
    %v505 = vpop.permute.xlu0 %504
    %506 = vrot.lane.b32.xlu0 %v494, 120
    %v507 = vpop.permute.xlu0 %506
    %v508 = vsel %vm227, %v505, %v507
    %v509 = vsel %vm227, %v507, %v505
    %v510 = vmul.f32 %v508, %v235
    %v511 = vmul.f32 %v509, %v235
    %512 = vst [vmem:[#allocation2 + $0x30] sm:$0xff] %v502
    %513 = vst [vmem:[#allocation2 + $0x38] sm:$0xff] %v503
    %514 = vst [vmem:[#allocation2 + $0x40] sm:$0xff] %v492
    %515 = vst [vmem:[#allocation2 + $0x48] sm:$0xff] %v494
    %516 = vst [vmem:[#allocation2 + $0x50] sm:$0xff] %v510
    %517 = vst [vmem:[#allocation2 + $0x58] sm:$0xff] %v511
    %518 = vrot.lane.b32.xlu0 %v502, 1
    %v519 = vpop.permute.xlu0 %518
    %520 = vrot.lane.b32.xlu0 %v492, 1
    %v521 = vpop.permute.xlu0 %520
    %522 = vrot.lane.b32.xlu0 %v510, 1
    %v523 = vpop.permute.xlu0 %522
    %524 = vrot.lane.b32.xlu0 %v503, 1
    %v525 = vpop.permute.xlu0 %524
    %526 = vrot.lane.b32.xlu0 %v494, 1
    %v527 = vpop.permute.xlu0 %526
    %528 = vrot.lane.b32.xlu0 %v511, 1
    %v529 = vpop.permute.xlu0 %528
    %v530 = vsel %vm276, %v519, %v525
    %v531 = vsel %vm276, %v521, %v527
    %v532 = vsel %vm276, %v523, %v529
    %v533 = vsel %vm276, %v525, %v519
    %v534 = vsel %vm276, %v527, %v521
    %v535 = vsel %vm276, %v529, %v523
    %v536 = vmul.f32 %v533, %v292
    %v537 = vmul.f32 %v530, %v292
    %v538 = vmul.f32 %v534, %v292
    %v539 = vmul.f32 %v531, %v292
    %v540 = vmul.f32 %v535, %v292
    %v541 = vmul.f32 %v532, %v292
    %542 = vst [vmem:[#allocation2] sm:$0xff] %v536
    %543 = vst [vmem:[#allocation2 + $0x8] sm:$0xff] %v537
    %544 = vst [vmem:[#allocation2 + $0x10] sm:$0xff] %v538
    %545 = vst [vmem:[#allocation2 + $0x18] sm:$0xff] %v539
    %546 = vst [vmem:[#allocation2 + $0x20] sm:$0xff] %v540
    %547 = vst [vmem:[#allocation2 + $0x28] sm:$0xff] %v541
    %548 = vrot.lane.b32.xlu0 %v502, 127
    %v549 = vpop.permute.xlu0 %548
    %550 = vrot.lane.b32.xlu0 %v492, 127
    %v551 = vpop.permute.xlu0 %550
    %552 = vrot.lane.b32.xlu0 %v510, 127
    %v553 = vpop.permute.xlu0 %552
    %554 = vrot.lane.b32.xlu0 %v503, 127
    %v555 = vpop.permute.xlu0 %554
    %556 = vrot.lane.b32.xlu0 %v494, 127
    %v557 = vpop.permute.xlu0 %556
    %558 = vrot.lane.b32.xlu0 %v511, 127
    %v559 = vpop.permute.xlu0 %558
    %v560 = vsel %vm341, %v549, %v555
    %v561 = vsel %vm341, %v551, %v557
    %v562 = vsel %vm341, %v553, %v559
    %v563 = vsel %vm341, %v555, %v549
    %v564 = vsel %vm341, %v557, %v551
    %v565 = vsel %vm341, %v559, %v553
    %v566 = vmul.f32 %v560, %v357
    %v567 = vmul.f32 %v563, %v357
    %v568 = vmul.f32 %v561, %v357
    %v569 = vmul.f32 %v564, %v357
    %v570 = vmul.f32 %v562, %v357
    %v571 = vmul.f32 %v565, %v357
    %572 = vst [vmem:[#allocation2 + $0x60] sm:$0xff] %v566
    %573 = vst [vmem:[#allocation2 + $0x68] sm:$0xff] %v567
    %574 = vst [vmem:[#allocation2 + $0x70] sm:$0xff] %v568
    %575 = vst [vmem:[#allocation2 + $0x78] sm:$0xff] %v569
    %576 = vst [vmem:[#allocation2 + $0x80] sm:$0xff] %v570
    %577 = vst [vmem:[#allocation2 + $0x88] sm:$0xff] %v571
    %v578 = vld [vmem:[#allocation14] sm:$0xff]
    %v579 = vld [vmem:[#allocation2] sm:$0xff]
    %v580 = vld [vmem:[#allocation2 + $0x8] sm:$0xff]
    %v581 = vld [vmem:[#allocation2 + $0x10] sm:$0xff]
    %v582 = vld [vmem:[#allocation2 + $0x18] sm:$0xff]
    %v583 = vld [vmem:[#allocation2 + $0x20] sm:$0xff]
    %v584 = vld [vmem:[#allocation2 + $0x28] sm:$0xff]
    %v585 = vld [vmem:[#allocation2 + $0x30] sm:$0xff]
    %v586 = vld [vmem:[#allocation2 + $0x38] sm:$0xff]
    %v587 = vld [vmem:[#allocation2 + $0x40] sm:$0xff]
    %v588 = vld [vmem:[#allocation2 + $0x48] sm:$0xff]
    %v589 = vld [vmem:[#allocation2 + $0x50] sm:$0xff]
    %v590 = vld [vmem:[#allocation2 + $0x58] sm:$0xff]
    %v591 = vld [vmem:[#allocation2 + $0x60] sm:$0xff]
    %v592 = vld [vmem:[#allocation2 + $0x68] sm:$0xff]
    %v593 = vld [vmem:[#allocation2 + $0x70] sm:$0xff]
    %v594 = vld [vmem:[#allocation2 + $0x78] sm:$0xff]
    %v595 = vld [vmem:[#allocation2 + $0x80] sm:$0xff]
    %v596 = vld [vmem:[#allocation2 + $0x88] sm:$0xff]
    %v597 = vld [vmem:[#allocation15] sm:$0xff]
    %599 = vset.pattern.permute.xlu0 0
    %600 = vperm.xlu0 %599, %v597
    %v601 = vpop.permute.xlu0 %600
    %vm603 = vcmask 588800
    %v605 = vsel %vm603, %v578, 0
    %607 = vmatprep.subr.mxu0 %v580
    %608 = vmatpush1.msra.mxu0 %v579
    %609 = vmatprep.subr.mxu0 %v582
    %610 = vmatpush1.msra.mxu0 %v581
    %611 = vmatprep.subr.mxu0 %v584
    %612 = vmatpush1.msra.mxu0 %v583
    %613 = vmatprep.subr.mxu0 %v586
    %614 = vmatpush1.msra.mxu0 %v585
    %615 = vmatprep.subr.mxu0 %v588
    %616 = vmatpush1.msra.mxu0 %v587
    %617 = vmatprep.subr.mxu0 %v590
    %618 = vmatpush1.msra.mxu0 %v589
    %619 = vmatprep.subr.mxu0 %v592
    %620 = vmatpush1.msra.mxu0 %v591
    %621 = vmatprep.subr.mxu0 %v594
    %622 = vmatpush1.msra.mxu0 %v593
    %623 = vmatprep.subr.mxu0 %v596
    %624 = vmatpush1.msra.mxu0 %v595
    %625 = vmatprep.subr.mxu0 0.0
    %626 = vmatpush1.msra.mxu0 0.0
    %627 = vmatprep.subr.mxu0 0.0
    %628 = vmatpush1.msra.mxu0 0.0
    %629 = vmatprep.subr.mxu0 0.0
    %630 = vmatpush1.msra.mxu0 0.0
    %631 = vmatprep.subr.mxu0 0.0
    %632 = vmatpush1.msra.mxu0 0.0
    %633 = vmatprep.subr.mxu0 0.0
    %634 = vmatpush1.msra.mxu0 0.0
    %635 = vmatprep.subr.mxu0 0.0
    %636 = vmatpush1.msra.mxu0 0.0
    %637 = vmatprep.subr.mxu0 0.0
    %638 = vmatpush1.msra.mxu0 0.0
    %639 = vmatprep.subr.mxu0 0.0
    %640 = vmatpush1.msra.mxu0 0.0
    %641 = vmatprep.subr.mxu0 0.0
    %642 = vmatpush1.msra.mxu0 0.0
    %643 = vmatprep.subr.mxu0 0.0
    %644 = vmatpush1.msra.mxu0 0.0
    %645 = vmatprep.subr.mxu0 0.0
    %646 = vmatpush1.msra.mxu0 0.0
    %647 = vmatprep.subr.mxu0 0.0
    %648 = vmatpush1.msra.mxu0 0.0
    %649 = vmatprep.subr.mxu0 0.0
    %650 = vmatpush1.msra.mxu0 0.0
    %651 = vmatprep.subr.mxu0 0.0
    %652 = vmatpush1.msra.mxu0 0.0
    %653 = vmatprep.subr.mxu0 0.0
    %654 = vmatpush1.msra.mxu0 0.0
    %655 = vmatprep.subr.mxu0 0.0
    %656 = vmatpush1.msra.mxu0 0.0
    %657 = vmatprep.subr.mxu0 0.0
    %658 = vmatpush1.msra.mxu0 0.0
    %659 = vmatprep.subr.mxu0 0.0
    %660 = vmatpush1.msra.mxu0 0.0
    %661 = vmatprep.subr.mxu0 0.0
    %662 = vmatpush1.msra.mxu0 0.0
    %663 = vmatprep.subr.mxu0 0.0
    %664 = vmatpush1.msra.mxu0 0.0
    %665 = vmatprep.subr.mxu0 0.0
    %666 = vmatpush1.msra.mxu0 0.0
    %667 = vmatprep.subr.mxu0 0.0
    %668 = vmatpush1.msra.mxu0 0.0
    %669 = vmatprep.subr.mxu0 0.0
    %670 = vmatpush1.msra.mxu0 0.0
    %671 = vmatprep.mubr.f32.mxu0 0.0
    %672 = vmatmul.mubr.f32.gmra.mrb[0].mxu0 %v605
    %v673 = vpop.f32.mrb[0].mxu0
    %v674 = vadd.f32 %v601, %v673
    %v675 = vpop.f32.mrb[0].mxu0
    %v676 = vadd.f32 %v601, %v675
    %677 = vdwg.mxu0
    %678 = vst [vmem:[#allocation17] sm:$0xff] %v674
    %s679 = scalar_lea.vmem [#allocation17], 8
    %680 = vst [vmem:[%s679] sm:$0xff] %v676
    // Predicated region
    $region66: #{down_pixel_w_pos.1} parent=1 // pred_check
      _
    $region67: #{down_pixel_w_pos.1} parent=1 // pred_check_branch
      %682 = sbr.rel (0) target = $region69
    $region68: #{down_pixel_w_pos.1} parent=1 // pred_region
      %s684 = ssub.s32 256, 256
      %685 = vsyncadd [#allocation5], %s684
      %s686 = sshll.u32 [#allocation17], 4
      %s687 = int_to_ptr.vmem [resolvable:$true] %s686
      %692 = dma.vmem_to_hbm [thread:$0]  %s687, 256, %s8, [#allocation5], 128, 128, 8
    $region69: #{down_pixel_w_pos.1} parent=1 // pred_fallthru
      _
    // Predicated region
    $region70: #{down_pixel_w_pos.1} parent=1 // pred_check
      _
    $region71: #{down_pixel_w_pos.1} parent=1 // pred_check_branch
      %694 = sbr.rel (0) target = $region73
    $region72: #{down_pixel_w_pos.1} parent=1 // pred_region
      %695 = dma.done [#allocation5], 256
    $region73: #{down_pixel_w_pos.1} parent=1 // pred_fallthru
      _
    %696 = vsyncpa [#allocation4], 1
    %697 = vsyncpa [#allocation7], 1
    %698 = vsyncpa [#allocation10], 1
    %699 = vsyncpa [#allocation13], 1
    %700 = vsyncpa [#allocation16], 1
    %701 = vsyncpa [#allocation5], 1

</llo_original>
